<compile_context>
chip_gen: v7x
topology: tpu7x:2x2x1
jax: 0.10.0
libtpu: 0.0.40
codegen_flags: <defaults>
</compile_context>

<pallas_src>
import functools

import jax
import jax.numpy as jnp
from jax import lax
from jax.experimental import pallas as pl
from jax.experimental.pallas import tpu as pltpu
import numpy as np


MOVING_AVERAGE_RATE = 0.999
_VMEM_LIMIT_BYTES = 32 * 1024 * 1024   # safe scoped budget on v5e/v6e/v7x
_EPS = 1e-12                           # F.normalize eps


def _choose_tile(hw_pad, cap=8192):
    """Largest divisor of hw_pad that is a multiple of 128 and <= cap."""
    best = 128
    hi = min(hw_pad, cap)
    for t in range(128, hi + 1, 128):
        if hw_pad % t == 0:
            best = t
    return best


# ---------------------------------------------------------------------------
# Pass 1: per-batch partial embed_sum / onehot_sum (assignment statistics).
# Batch axis "parallel" (megacore on v7x), token-tile axis "arbitrary"
# (per-batch resident accumulators in the output blocks).
# ---------------------------------------------------------------------------
def _sml_accum_kernel(x_ref, mn_ref, esum_ref, csum_ref, *, n_valid, tile,
                      need_mask):
    # x_ref:    (C, T)   token tile, tokens on lanes
    # mn_ref:   (K, C)   pre-normalized memory bank (grid-invariant block)
    # esum_ref: (C, K)   per-batch partial  sum_t x[:,t] * onehot[k,t]
    # csum_ref: (1, K)   per-batch partial  sum_t onehot[k,t]
    ti = pl.program_id(1)

    @pl.when(ti == 0)
    def _init():
        esum_ref[...] = jnp.zeros_like(esum_ref)
        csum_ref[...] = jnp.zeros_like(csum_ref)

    x_t = x_ref[...].astype(jnp.float32)          # (C, T)
    mn = mn_ref[...]                              # (K, C), f32

    # argmax_k <x/||x||, m_k/||m_k||> == argmax_k <x, m_k/||m_k||>
    # (positive per-token scale preserves argmax), so x needs no normalize here.
    # Kept in f32 so tie-breaking matches the PyTorch reference exactly.
    score = jnp.einsum("kc,ct->kt", mn, x_t,
                       preferred_element_type=jnp.float32)            # (K, T)

    # First-index argmax over K (sublane axis), matching torch.max / jnp.argmax.
    row_ids = lax.broadcasted_iota(jnp.int32, score.shape, 0)         # (K, T)
    col_max = jnp.max(score, axis=0, keepdims=True)                   # (1, T)
    big = jnp.int32(np.iinfo(np.int32).max)
    first_idx = jnp.min(jnp.where(score == col_max, row_ids, big),
                        axis=0, keepdims=True)                        # (1, T)
    onehot = (row_ids == first_idx).astype(jnp.float32)               # (K, T)

    if need_mask:
        # Zero out contributions from padded tokens (HW padded to 128-multiple).
        tok = ti * tile + lax.broadcasted_iota(jnp.int32, (1, x_t.shape[1]), 1)
        onehot = onehot * (tok < n_valid).astype(jnp.float32)

    # Counts via an MXU matvec over the token axis (keeps the XLU free).
    ones_row = jnp.ones((1, x_t.shape[1]), jnp.float32)               # (1, T)
    csum_ref[...] += jnp.einsum("ot,kt->ok", ones_row, onehot,
                                preferred_element_type=jnp.float32)   # (1, K)
    esum_ref[...] += jnp.einsum("ct,kt->ck", x_t, onehot,
                                preferred_element_type=jnp.float32)   # (C, K)


# ---------------------------------------------------------------------------
# Pass 2: per-tile softmax lookup against the finalized new_m (fully parallel).
# ---------------------------------------------------------------------------
def _sml_emit_kernel(x_ref, mn_ref, newm_ref, out_ref):
    # x_ref:    (C, T)   token tile
    # mn_ref:   (K, C)   pre-normalized original memory (for the score)
    # newm_ref: (K, C)   EMA-updated memory (for the output matmul)
    # out_ref:  (C, T)   lane-dense output tile
    x_t = x_ref[...].astype(jnp.float32)
    mn = mn_ref[...]                                   # (K, C), f32
    new_m = newm_ref[...]                              # (K, C), f32

    # F.normalize over C (sublane axis) via EUP rsqrt.
    xn = x_t * lax.rsqrt(jnp.maximum(jnp.sum(x_t * x_t, axis=0, keepdims=True),
                                     _EPS * _EPS))                    # (C, T)

    # bf16 MXU operands, f32 accumulation (3x MXU throughput; score only feeds
    # softmax, so the ~1e-3 rounding is benign).
    score = jnp.einsum("kc,ct->kt",
                       mn.astype(jnp.bfloat16), xn.astype(jnp.bfloat16),
                       preferred_element_type=jnp.float32)            # (K, T)

    # Softmax over K (sublane axis); denominator folded past the output matmul.
    s = score - jnp.max(score, axis=0, keepdims=True)
    e = jnp.exp(s)                                                    # (K, T)
    denom = jnp.sum(e, axis=0, keepdims=True)                         # (1, T)

    out_t = jnp.einsum("kc,kt->ct",
                       new_m.astype(jnp.bfloat16), e.astype(jnp.bfloat16),
                       preferred_element_type=jnp.float32)            # (C, T)
    out_t = out_t * pl.reciprocal(denom, approx=True)
    out_ref[...] = out_t.astype(out_ref.dtype)


# ---------------------------------------------------------------------------
# Wrapper
# ---------------------------------------------------------------------------
def sml_forward(x_nchw, units_weight, *, tile_cap=8192):
    """x_nchw: (B, C, H, W), units_weight: (K, C).
    Returns (out_nchw, new_units_weight) matching PyTorch SML.forward.
    The EMA-updated memory is returned functionally instead of mutating an
    Embedding buffer."""
    b, c, h, w = x_nchw.shape
    k = units_weight.shape[0]
    hw = h * w
    hw_pad = ((hw + 127) // 128) * 128
    need_mask = hw_pad != hw
    tile = _choose_tile(hw_pad, tile_cap)
    n_t = hw_pad // tile

    # Free reshape (merges trailing dims) -- no transpose round-trip.
    x3 = x_nchw.reshape(b, c, hw)
    if need_mask:
        x3 = jnp.pad(x3, ((0, 0), (0, 0), (0, hw_pad - hw)))

    # Normalize the memory bank ONCE (grid-invariant), feed to both passes.
    m32 = units_weight.astype(jnp.float32)
    mn = m32 * lax.rsqrt(jnp.maximum(jnp.sum(m32 * m32, axis=1, keepdims=True),
                                     _EPS * _EPS))                    # (K, C)

    itemsize = x3.dtype.itemsize

    # ---- Pass 1: per-batch partial statistics (batch-parallel). ----
    accum_cost = pl.CostEstimate(
        flops=int(4 * k * c * hw_pad * b),
        transcendentals=0,
        bytes_accessed=int(b * c * hw_pad * itemsize + k * c * 4
                           + b * (c + 1) * k * 4))

    esum, csum = pl.pallas_call(
        functools.partial(_sml_accum_kernel, n_valid=hw, tile=tile,
                          need_mask=need_mask),
        out_shape=(jax.ShapeDtypeStruct((b, c, k), jnp.float32),
                   jax.ShapeDtypeStruct((b, 1, k), jnp.float32)),
        grid=(b, n_t),
        in_specs=[
            pl.BlockSpec((None, c, tile), lambda bi, ti: (bi, 0, ti)),
            pl.BlockSpec((k, c), lambda bi, ti: (0, 0)),
        ],
        out_specs=(
            pl.BlockSpec((None, c, k), lambda bi, ti: (bi, 0, 0)),
            pl.BlockSpec((None, 1, k), lambda bi, ti: (bi, 0, 0)),
        ),
        compiler_params=pltpu.CompilerParams(
            dimension_semantics=("parallel", "arbitrary"),
            vmem_limit_bytes=_VMEM_LIMIT_BYTES,
        ),
        cost_estimate=accum_cost,
    )(x3, mn)

    # Tiny cross-batch reduce + EMA finalize in plain jnp (O(K*C)).
    embed_sum = jnp.sum(esum, axis=0)                       # (C, K)
    onehot_sum = jnp.sum(csum, axis=0)                      # (1, K)
    embed_mean = embed_sum / (onehot_sum + 1e-6)            # (C, K)
    rate = jnp.float32(MOVING_AVERAGE_RATE)
    new_m32 = m32 * rate + embed_mean.T * (1.0 - rate)      # (K, C) f32
    new_m = new_m32.astype(units_weight.dtype)

    # ---- Pass 2: emit; tiles independent -> fully parallel. ----
    emit_cost = pl.CostEstimate(
        flops=int(4 * k * c * hw_pad * b),
        transcendentals=int(k * hw_pad * b + hw_pad * b),
        bytes_accessed=int(2 * b * c * hw_pad * itemsize + 2 * k * c * 4))

    out3 = pl.pallas_call(
        _sml_emit_kernel,
        out_shape=jax.ShapeDtypeStruct((b, c, hw_pad), x_nchw.dtype),
        grid=(b, n_t),
        in_specs=[
            pl.BlockSpec((None, c, tile), lambda bi, ti: (bi, 0, ti)),
            pl.BlockSpec((k, c), lambda bi, ti: (0, 0)),
            pl.BlockSpec((k, c), lambda bi, ti: (0, 0)),
        ],
        out_specs=pl.BlockSpec((None, c, tile), lambda bi, ti: (bi, 0, ti)),
        compiler_params=pltpu.CompilerParams(
            dimension_semantics=("parallel", "parallel"),
            vmem_limit_bytes=_VMEM_LIMIT_BYTES,
        ),
        cost_estimate=emit_cost,
    )(x3, mn, new_m32)

    out_nchw = out3[:, :, :hw].reshape(b, c, h, w)
    return out_nchw, new_m


def _sml_reference(x_nchw, units_weight):
    """Pure-JAX reference mirroring the PyTorch forward, for verification."""
    b, c, h, w = x_nchw.shape
    k = units_weight.shape[0]
    x = jnp.transpose(x_nchw, (0, 2, 3, 1)).reshape(-1, c)
    m = units_weight
    xn = x / jnp.maximum(jnp.linalg.norm(x, axis=1, keepdims=True), 1e-12)
    mn = m / jnp.maximum(jnp.linalg.norm(m, axis=1, keepdims=True), 1e-12)
    score = xn @ mn.T
    embed_ind = jnp.argmax(score, axis=1)
    onehot = jax.nn.one_hot(embed_ind, k, dtype=x.dtype)
    onehot_sum = onehot.sum(0)
    embed_sum = x.T @ onehot
    embed_mean = embed_sum / (onehot_sum + 1e-6)
    new_m = m * MOVING_AVERAGE_RATE + embed_mean.T * (1 - MOVING_AVERAGE_RATE)
    soft = jax.nn.softmax(score, axis=1)
    out = soft @ new_m
    return jnp.transpose(out.reshape(b, h, w, c), (0, 3, 1, 2)), new_m


if __name__ == "__main__":
    # Shapes consistent with the module: B=2, hdim(C)=32, kdim(K)=64, H=W=16.
    B, C, H, W, K = 2, 32, 16, 16, 64

    key = jax.random.PRNGKey(0)
    kx, km, kx2 = jax.random.split(key, 3)
    x = jax.random.normal(kx, (B, C, H, W), dtype=jnp.float32)
    units_weight = jax.random.normal(km, (K, C), dtype=jnp.float32)

    # tile_cap=128 splits HW=256 into two 128-lane tiles per image, exercising
    # the multi-tile accumulate/emit grid path even at these small test shapes.
    out, new_m = sml_forward(x, units_weight, tile_cap=128)
    out = jax.block_until_ready(out)
    new_m = jax.block_until_ready(new_m)

    ref_out, ref_m = _sml_reference(x, units_weight)
    assert out.shape == (B, C, H, W)
    # Pass 1 stays f32 -> tight tolerance on the updated memory.
    np.testing.assert_allclose(np.asarray(new_m), np.asarray(ref_m),
                               rtol=2e-5, atol=2e-5)
    # Pass 2 uses bf16 MXU operands + EUP approximate reciprocal -> looser.
    np.testing.assert_allclose(np.asarray(out), np.asarray(ref_out),
                               rtol=1e-2, atol=1e-2)

    # Ragged-HW path: HW=225 is not a multiple of 128 -> padded + masked tail.
    H2 = W2 = 15
    x2 = jax.random.normal(kx2, (B, C, H2, W2), dtype=jnp.float32)
    out2, new_m2 = sml_forward(x2, units_weight, tile_cap=128)
    out2 = jax.block_until_ready(out2)
    ref_out2, ref_m2 = _sml_reference(x2, units_weight)
    assert out2.shape == (B, C, H2, W2)
    np.testing.assert_allclose(np.asarray(new_m2), np.asarray(ref_m2),
                               rtol=2e-5, atol=2e-5)
    np.testing.assert_allclose(np.asarray(out2), np.asarray(ref_out2),
                               rtol=1e-2, atol=1e-2)

    print("KERNEL_OK")
</pallas_src>

<mosaic_0001>
module attributes {stable_mosaic.version = 11 : i64} {
  func.func @_sml_accum_kernel(%arg0: i32, %arg1: i32, %arg2: memref<1x32x128xf32, #tpu.memory_space<vmem>>, %arg3: memref<64x32xf32, #tpu.memory_space<vmem>>, %arg4: memref<1x32x64xf32, #tpu.memory_space<vmem>>, %arg5: memref<1x1x64xf32, #tpu.memory_space<vmem>>) attributes {dimension_semantics = [#tpu.dimension_semantics<parallel>, #tpu.dimension_semantics<arbitrary>], iteration_bounds = array<i64: 2, 2>, scalar_prefetch = 0 : i64, scratch_operands = 0 : i64, tpu.core_type = #tpu.core_type<tc>, window_params = [{transform_indices = @transform_0, window_bounds = array<i64: 1, 32, 128>}, {pipeline_mode = #tpu.pipeline_mode<synchronous>, transform_indices = @transform_1, window_bounds = array<i64: 64, 32>}, {transform_indices = @transform_2, window_bounds = array<i64: 1, 32, 64>}, {transform_indices = @transform_3, window_bounds = array<i64: 1, 1, 64>}]} {
    %c0_i32 = arith.constant 0 : i32
    %0 = arith.cmpi eq, %arg1, %c0_i32 : i32
    %1 = arith.extui %0 : i1 to i32
    %c0_i32_0 = arith.constant 0 : i32
    %2 = arith.cmpi ne, %1, %c0_i32_0 : i32
    scf.if %2 {
      %cst_22 = arith.constant 0.000000e+00 : f32
      %35 = vector.broadcast %cst_22 : f32 to vector<32x64xf32>
      %c0_23 = arith.constant 0 : index
      %c0_24 = arith.constant 0 : index
      %c0_25 = arith.constant 0 : index
      %36 = vector.load %arg4[%c0_23, %c0_24, %c0_25] : memref<1x32x64xf32, #tpu.memory_space<vmem>>, vector<1x32x64xf32>
      %37 = vector.shape_cast %36 : vector<1x32x64xf32> to vector<32x64xf32>
      %38 = vector.shape_cast %35 : vector<32x64xf32> to vector<1x32x64xf32>
      tpu.vector_store %arg4[%c0_23, %c0_24, %c0_25], %38 {strides = array<i32>} : memref<1x32x64xf32, #tpu.memory_space<vmem>>, vector<1x32x64xf32>,
      %cst_26 = arith.constant 0.000000e+00 : f32
      %39 = vector.broadcast %cst_26 : f32 to vector<1x64xf32>
      %c0_27 = arith.constant 0 : index
      %c0_28 = arith.constant 0 : index
      %c0_29 = arith.constant 0 : index
      %40 = vector.load %arg5[%c0_27, %c0_28, %c0_29] : memref<1x1x64xf32, #tpu.memory_space<vmem>>, vector<1x1x64xf32>
      %41 = vector.shape_cast %40 : vector<1x1x64xf32> to vector<1x64xf32>
      %42 = vector.shape_cast %39 : vector<1x64xf32> to vector<1x1x64xf32>
      tpu.vector_store %arg5[%c0_27, %c0_28, %c0_29], %42 {strides = array<i32>} : memref<1x1x64xf32, #tpu.memory_space<vmem>>, vector<1x1x64xf32>,
    } else {
    }
    %c0 = arith.constant 0 : index
    %c0_1 = arith.constant 0 : index
    %c0_2 = arith.constant 0 : index
    %3 = vector.load %arg2[%c0, %c0_1, %c0_2] : memref<1x32x128xf32, #tpu.memory_space<vmem>>, vector<1x32x128xf32>
    %4 = vector.shape_cast %3 : vector<1x32x128xf32> to vector<32x128xf32>
    %c0_3 = arith.constant 0 : index
    %c0_4 = arith.constant 0 : index
    %5 = vector.load %arg3[%c0_3, %c0_4] : memref<64x32xf32, #tpu.memory_space<vmem>>, vector<64x32xf32>
    "tpu.trace_start"() <{level = 10 : i32, message = "kc,ct->kt"}> : () -> ()
    %cst = arith.constant dense<0.000000e+00> : vector<64x128xf32>
    %6 = tpu.matmul %5, %4, %cst {dimension_numbers = #tpu.dot_dimension_numbers<[1], [0], [0], [1], [0, 0, 1, 1], [], []>} : vector<64x32xf32>, vector<32x128xf32>, vector<64x128xf32> -> vector<64x128xf32>
    "tpu.trace_stop"() : () -> ()
    %7 = tpu.iota {dimensions = array<i32: 0>} : vector<64x128xi32>
    %cst_5 = arith.constant dense<0xFF800000> : vector<128xf32>
    %8 = vector.multi_reduction <maximumf>, %6, %cst_5 [0] : vector<64x128xf32> to vector<128xf32>
    %9 = vector.shape_cast %8 : vector<128xf32> to vector<1x128xf32>
    %10 = vector.broadcast %9 : vector<1x128xf32> to vector<64x128xf32>
    %11 = arith.cmpf oeq, %6, %10 : vector<64x128xf32>
    %c2147483647_i32 = arith.constant 2147483647 : i32
    %12 = vector.broadcast %c2147483647_i32 : i32 to vector<64x128xi32>
    %13 = arith.select %11, %7, %12 : vector<64x128xi1>, vector<64x128xi32>
    %cst_6 = arith.constant dense<2147483647> : vector<128xi32>
    %14 = vector.multi_reduction <minsi>, %13, %cst_6 [0] : vector<64x128xi32> to vector<128xi32>
    %15 = vector.shape_cast %14 : vector<128xi32> to vector<1x128xi32>
    %16 = vector.broadcast %15 : vector<1x128xi32> to vector<64x128xi32>
    %17 = arith.cmpi eq, %7, %16 : vector<64x128xi32>
    %18 = arith.extui %17 : vector<64x128xi1> to vector<64x128xi32>
    %19 = arith.sitofp %18 : vector<64x128xi32> to vector<64x128xf32>
    %cst_7 = arith.constant 1.000000e+00 : f32
    %20 = vector.broadcast %cst_7 : f32 to vector<1x128xf32>
    %c0_8 = arith.constant 0 : index
    %c0_9 = arith.constant 0 : index
    %c0_10 = arith.constant 0 : index
    %21 = vector.load %arg5[%c0_8, %c0_9, %c0_10] : memref<1x1x64xf32, #tpu.memory_space<vmem>>, vector<1x1x64xf32>
    %22 = vector.shape_cast %21 : vector<1x1x64xf32> to vector<1x64xf32>
    "tpu.trace_start"() <{level = 10 : i32, message = "ot,kt->ok"}> : () -> ()
    %cst_11 = arith.constant dense<0.000000e+00> : vector<1x64xf32>
    %23 = tpu.matmul %20, %19, %cst_11 {dimension_numbers = #tpu.dot_dimension_numbers<[1], [1], [0], [0], [0, 0, 1, 0], [], []>} : vector<1x128xf32>, vector<64x128xf32>, vector<1x64xf32> -> vector<1x64xf32>
    "tpu.trace_stop"() : () -> ()
    %24 = arith.addf %22, %23 : vector<1x64xf32>
    %c0_12 = arith.constant 0 : index
    %c0_13 = arith.constant 0 : index
    %c0_14 = arith.constant 0 : index
    %25 = vector.load %arg5[%c0_12, %c0_13, %c0_14] : memref<1x1x64xf32, #tpu.memory_space<vmem>>, vector<1x1x64xf32>
    %26 = vector.shape_cast %25 : vector<1x1x64xf32> to vector<1x64xf32>
    %27 = vector.shape_cast %24 : vector<1x64xf32> to vector<1x1x64xf32>
    tpu.vector_store %arg5[%c0_12, %c0_13, %c0_14], %27 {strides = array<i32>} : memref<1x1x64xf32, #tpu.memory_space<vmem>>, vector<1x1x64xf32>,
    %c0_15 = arith.constant 0 : index
    %c0_16 = arith.constant 0 : index
    %c0_17 = arith.constant 0 : index
    %28 = vector.load %arg4[%c0_15, %c0_16, %c0_17] : memref<1x32x64xf32, #tpu.memory_space<vmem>>, vector<1x32x64xf32>
    %29 = vector.shape_cast %28 : vector<1x32x64xf32> to vector<32x64xf32>
    "tpu.trace_start"() <{level = 10 : i32, message = "ct,kt->ck"}> : () -> ()
    %cst_18 = arith.constant dense<0.000000e+00> : vector<32x64xf32>
    %30 = tpu.matmul %4, %19, %cst_18 {dimension_numbers = #tpu.dot_dimension_numbers<[1], [1], [0], [0], [0, 0, 1, 0], [], []>} : vector<32x128xf32>, vector<64x128xf32>, vector<32x64xf32> -> vector<32x64xf32>
    "tpu.trace_stop"() : () -> ()
    %31 = arith.addf %29, %30 : vector<32x64xf32>
    %c0_19 = arith.constant 0 : index
    %c0_20 = arith.constant 0 : index
    %c0_21 = arith.constant 0 : index
    %32 = vector.load %arg4[%c0_19, %c0_20, %c0_21] : memref<1x32x64xf32, #tpu.memory_space<vmem>>, vector<1x32x64xf32>
    %33 = vector.shape_cast %32 : vector<1x32x64xf32> to vector<32x64xf32>
    %34 = vector.shape_cast %31 : vector<32x64xf32> to vector<1x32x64xf32>
    tpu.vector_store %arg4[%c0_19, %c0_20, %c0_21], %34 {strides = array<i32>} : memref<1x32x64xf32, #tpu.memory_space<vmem>>, vector<1x32x64xf32>,
    return
  }
  func.func @transform_0(%arg0: i32, %arg1: i32) -> (i32, i32, i32) {
    %c0_i32 = arith.constant 0 : i32
    %c0_i32_0 = arith.constant 0 : i32
    return %arg0, %c0_i32, %arg1 : i32, i32, i32
  }
  func.func @transform_1(%arg0: i32, %arg1: i32) -> (i32, i32) {
    %c0_i32 = arith.constant 0 : i32
    %c0_i32_0 = arith.constant 0 : i32
    %c0_i32_1 = arith.constant 0 : i32
    return %c0_i32, %c0_i32_0 : i32, i32
  }
  func.func @transform_2(%arg0: i32, %arg1: i32) -> (i32, i32, i32) {
    %c0_i32 = arith.constant 0 : i32
    %c0_i32_0 = arith.constant 0 : i32
    %c0_i32_1 = arith.constant 0 : i32
    return %arg0, %c0_i32, %c0_i32_0 : i32, i32, i32
  }
  func.func @transform_3(%arg0: i32, %arg1: i32) -> (i32, i32, i32) {
    %c0_i32 = arith.constant 0 : i32
    %c0_i32_0 = arith.constant 0 : i32
    %c0_i32_1 = arith.constant 0 : i32
    return %arg0, %c0_i32, %c0_i32_0 : i32, i32, i32
  }
}

</mosaic_0001>

<llo_original>
// kernel: tpu_custom_call.1
$region0: #{tpu_custom_call.1}
  #allocation0 [shape = 'u32[]', space=smem, size = 0x4, offset = 0x4, fixed_abs, tag = 'smem constant byte address 0x4 - core index']
  #allocation1 [shape = 'u32[144,128]{1,0:T(1,128)}', space=vmem, size = 0x12000, scoped, tag = 'internal scratch']
  %s0 = inlined_call_operand.hbm [shape: f32[2,32,256], index: 0, kind: input, shape index: {}]
  %s1 = inlined_call_operand.vmem [shape: f32[64,32], index: 1, kind: input, shape index: {}]
  %s2 = inlined_call_operand.hbm [shape: f32[2,32,64], index: 2, kind: output, shape index: {0}]
  %s3 = inlined_call_operand.hbm [shape: f32[2,1,64], index: 3, kind: output, shape index: {1}]
  %4 = xla_tuple %s2, %s3
  %s5 = sld [smem:[#allocation0]]
  $region57: #{tpu_custom_call.1} parent=0
    _
  %s7 = ssub.s32 1, %s5
  %s8 = scalar_select 0, %s7, %s5
  $region1: #{tpu_custom_call.1} parent=0
    #allocation2 [shape = 'u8[32768]{0}', space=vmem, size = 0x8000, scoped, tag = 'input window, operand 0']
    #allocation3 [shape = 's32[2]{0}', space=sflag, size = 0x8, scoped, tag = 'scoped memory for tpu_custom_call.1']
    #allocation4 [shape = 's32[2]{0}', space=sflag, size = 0x8, scoped, tag = 'scoped memory for tpu_custom_call.1']
    #allocation5 [shape = 'u8[32768]{0}', space=vmem, size = 0x8000, scoped, tag = 'output window, operand 0']
    #allocation6 [shape = 'u8[1024]{0}', space=vmem, size = 0x400, scoped, tag = 'output window, operand 1']
    #allocation7 [shape = 's32[2]{0}', space=sflag, size = 0x8, scoped, tag = 'scoped memory for tpu_custom_call.1']
    %9 = vsyncpa [#allocation3], 0
    %s10 = scalar_lea.sflag [#allocation3], 1
    %11 = vsyncpa %s10, 0
    %12 = vsyncpa [#allocation4], 0
    %s13 = scalar_lea.sflag [#allocation4], 1
    %14 = vsyncpa %s13, 0
    %15 = vsyncpa [#allocation7], 0
    %s16 = scalar_lea.sflag [#allocation7], 1
    %17 = vsyncpa %s16, 0
    loop: start=0, step=1, limit=6
    $region2: #{tpu_custom_call.1} parent=1 // loop_pre_header
      _
    $region3: #{tpu_custom_call.1} parent=1 // loop_header
      %s19 = sphi 0, %s23
      %p20 = scmp.ge.s32.totalorder %s19, 6
      %s26 = sphi 0, %s38
      %s27 = sphi 0, %s34
      %s28 = sphi 0, %s26
      %s29 = sphi 0, %s27
      %s30 = sphi 0, %s28
      %s31 = sphi 0, %s29
      %s43 = sphi 0, %s45
      %s46 = sphi 0, %s43
      %s47 = sphi 0, %s46
      %s63 = sphi 0, %s47
      %s67 = sphi 0, %s67
      %s69 = sphi 0, %s67
      %s70 = sphi 0, %s69
      %s84 = sphi 0, %s70
      %s90 = sphi 0, %s92
      %s93 = sphi 0, %s90
      %s94 = sphi 0, %s93
      %s110 = sphi 0, %s94
      %s116 = sphi 0, %s118
      %s119 = sphi 0, %s116
      %s120 = sphi 0, %s119
      %s136 = sphi 0, %s120
    $region4: #{tpu_custom_call.1} parent=1 // loop_header_branch
      %22 = sbr.rel (%p20) target = $region8
    $region5: #{tpu_custom_call.1} parent=1 // loop_body
      %s24 = ssub.s32 %s19, 1
      %s25 = ssub.s32 %s19, 2
      %s32 = sadd.s32 1, %s27
      %p33 = scmp.ge.s32.totalorder %s32, 2
      %s34 = scalar_select %p33, 0, %s32
      %s35 = sadd.s32 1, %s26
      %s36 = scalar_select %p33, %s35, %s26
      %p37 = scmp.ge.s32.totalorder %s36, 2
      %s38 = scalar_select %p37, 0, %s36
      %s39 = ssub.s32 %s26, %s38
      %s40 = ssub.s32 %s27, %s34
      %s41 = sor.u32 %s39, %s40
      %p42 = scmp.eq.s32.totalorder %s41, 0
      %s44 = sadd.s32 %s43, 1
      %s45 = scalar_select %p42, %s43, %s44
      %p48 = pneg %p42
      %p49 = scmp.eq.s32.totalorder %s19, 3
      %p50 = por %p48, %p49
      %p51 = scmp.ne.s32.totalorder %s43, %s46
      %p52 = scmp.eq.s32.totalorder %s19, 0
      %p53 = por %p51, %p52
      %p54 = scmp.ne.s32.totalorder %s43, %s46
      %p55 = scmp.eq.s32.totalorder %s24, 3
      %p56 = por %p54, %p55
      %p57 = scmp.ne.s32.totalorder %s46, %s47
      %p58 = scmp.eq.s32.totalorder %s24, 0
      %p59 = por %p57, %p58
      %p60 = scmp.ne.s32.totalorder %s46, %s47
      %p61 = scmp.eq.s32.totalorder %s25, 3
      %p62 = por %p60, %p61
      %p64 = scmp.ne.s32.totalorder %s47, %s63
      %p65 = scmp.eq.s32.totalorder %s25, 0
      %p66 = por %p64, %p65
      %s68 = sadd.s32 %s67, 1
      %p71 = scmp.eq.s32.totalorder %s19, 3
      %p72 = scmp.ne.s32.totalorder %s67, %s69
      %p73 = scmp.eq.s32.totalorder %s19, 0
      %p74 = por %p72, %p73
      %p75 = scmp.ne.s32.totalorder %s67, %s69
      %p76 = scmp.eq.s32.totalorder %s24, 3
      %p77 = por %p75, %p76
      %p78 = scmp.ne.s32.totalorder %s69, %s70
      %p79 = scmp.eq.s32.totalorder %s24, 0
      %p80 = por %p78, %p79
      %p81 = scmp.ne.s32.totalorder %s69, %s70
      %p82 = scmp.eq.s32.totalorder %s25, 3
      %p83 = por %p81, %p82
      %p85 = scmp.ne.s32.totalorder %s70, %s84
      %p86 = scmp.eq.s32.totalorder %s25, 0
      %p87 = por %p85, %p86
      %s88 = ssub.s32 %s26, %s38
      %p89 = scmp.eq.s32.totalorder %s88, 0
      %s91 = sadd.s32 %s90, 1
      %s92 = scalar_select %p89, %s90, %s91
      %p95 = pneg %p89
      %p96 = scmp.eq.s32.totalorder %s19, 3
      %p97 = por %p95, %p96
      %p98 = scmp.ne.s32.totalorder %s90, %s93
      %p99 = scmp.eq.s32.totalorder %s19, 0
      %p100 = por %p98, %p99
      %p101 = scmp.ne.s32.totalorder %s90, %s93
      %p102 = scmp.eq.s32.totalorder %s24, 3
      %p103 = por %p101, %p102
      %p104 = scmp.ne.s32.totalorder %s93, %s94
      %p105 = scmp.eq.s32.totalorder %s24, 0
      %p106 = por %p104, %p105
      %p107 = scmp.ne.s32.totalorder %s93, %s94
      %p108 = scmp.eq.s32.totalorder %s25, 3
      %p109 = por %p107, %p108
      %p111 = scmp.ne.s32.totalorder %s94, %s110
      %p112 = scmp.eq.s32.totalorder %s25, 0
      %p113 = por %p111, %p112
      %s114 = ssub.s32 %s26, %s38
      %p115 = scmp.eq.s32.totalorder %s114, 0
      %s117 = sadd.s32 %s116, 1
      %s118 = scalar_select %p115, %s116, %s117
      %p121 = pneg %p115
      %p122 = scmp.eq.s32.totalorder %s19, 3
      %p123 = por %p121, %p122
      %p124 = scmp.ne.s32.totalorder %s116, %s119
      %p125 = scmp.eq.s32.totalorder %s19, 0
      %p126 = por %p124, %p125
      %p127 = scmp.ne.s32.totalorder %s116, %s119
      %p128 = scmp.eq.s32.totalorder %s24, 3
      %p129 = por %p127, %p128
      %p130 = scmp.ne.s32.totalorder %s119, %s120
      %p131 = scmp.eq.s32.totalorder %s24, 0
      %p132 = por %p130, %p131
      %p133 = scmp.ne.s32.totalorder %s119, %s120
      %p134 = scmp.eq.s32.totalorder %s25, 3
      %p135 = por %p133, %p134
      %p137 = scmp.ne.s32.totalorder %s120, %s136
      %p138 = scmp.eq.s32.totalorder %s25, 0
      %p139 = por %p137, %p138
      %p140 = scmp.le.s32.totalorder 1, %s19
      %p141 = scmp.lt.s32.totalorder %s19, 5
      %p142 = pnand %p140, %p141
      %p143 = pneg %p142
      // Predicated region
      $region9: #{tpu_custom_call.1} parent=5 // pred_check
        _
      $region10: #{tpu_custom_call.1} parent=5 // pred_check_branch
        %145 = sbr.rel (%p142) target = $region12
      $region11: #{tpu_custom_call.1} parent=5 // pred_region
        %s146 = ssub.s32 %s19, 1
        // Predicated region
        $region13: #{tpu_custom_call.1} parent=11 // pred_check
          %p147 = pneg %p80
        $region14: #{tpu_custom_call.1} parent=11 // pred_check_branch
          %149 = sbr.rel (%p147) target = $region16
        $region15: #{tpu_custom_call.1} parent=11 // pred_region
          _
        $region16: #{tpu_custom_call.1} parent=11 // pred_fallthru
          _
      $region12: #{tpu_custom_call.1} parent=5 // pred_fallthru
        _
      %p150 = scmp.lt.s32.totalorder %s19, 4
      // Predicated region
      $region17: #{tpu_custom_call.1} parent=5 // pred_check
        %p151 = pneg %p150
      $region18: #{tpu_custom_call.1} parent=5 // pred_check_branch
        %153 = sbr.rel (%p151) target = $region20
      $region19: #{tpu_custom_call.1} parent=5 // pred_region
        // Predicated region
        $region21: #{tpu_custom_call.1} parent=19 // pred_check
          %p154 = pneg %p53
        $region22: #{tpu_custom_call.1} parent=19 // pred_check_branch
          %156 = sbr.rel (%p154) target = $region24
        $region23: #{tpu_custom_call.1} parent=19 // pred_region
          %s157 = sand.u32 %s43, 1
          %s158 = scalar_lea.sflag [#allocation3], %s157
          %s159 = sand.u32 %s43, 1
          %s160 = smul.addr %s159, 32
          %s161 = scalar_lea.vmem [#allocation2], %s160
          %s163 = ssub.s32 512, 512
          %164 = vsyncadd %s158, %s163
          %s165 = smul.addr %s26, 8
          %s166 = sadd.s32 %s27, %s165
          %s167 = smul.addr %s166, 128
          %s168 = scalar_lea.hbm %s0, %s167
          %s169 = sshll.u32 %s161, 4
          %s170 = int_to_ptr.vmem [resolvable:$true] %s169
          %175 = dma.hbm_to_vmem [thread:$0]  %s168, 512, %s170, %s158, 256, 128, 8
        $region24: #{tpu_custom_call.1} parent=19 // pred_fallthru
          _
      $region20: #{tpu_custom_call.1} parent=5 // pred_fallthru
        _
      %p176 = scmp.le.s32.totalorder 1, %s19
      %p177 = scmp.lt.s32.totalorder %s19, 5
      %p178 = pnand %p176, %p177
      %p179 = pneg %p178
      // Predicated region
      $region25: #{tpu_custom_call.1} parent=5 // pred_check
        _
      $region26: #{tpu_custom_call.1} parent=5 // pred_check_branch
        %181 = sbr.rel (%p178) target = $region28
      $region27: #{tpu_custom_call.1} parent=5 // pred_region
        %s182 = ssub.s32 %s19, 1
        %s183 = sand.u32 %s46, 1
        %s184 = scalar_lea.sflag [#allocation3], %s183
        %s185 = sand.u32 %s46, 1
        %s186 = smul.addr %s185, 32
        %s187 = scalar_lea.vmem [#allocation2], %s186
        // Predicated region
        $region29: #{tpu_custom_call.1} parent=27 // pred_check
          %p188 = pneg %p59
        $region30: #{tpu_custom_call.1} parent=27 // pred_check_branch
          %190 = sbr.rel (%p188) target = $region32
        $region31: #{tpu_custom_call.1} parent=27 // pred_region
          %191 = dma.done %s184, 512
        $region32: #{tpu_custom_call.1} parent=27 // pred_fallthru
          _
        %s192 = sand.u32 %s46, 1
        %s193 = scalar_lea.sflag [#allocation3], %s192
        %s194 = sand.u32 %s46, 1
        %s195 = smul.addr %s194, 32
        %s196 = scalar_lea.vmem [#allocation2], %s195
        %p197 = pneg %p59
        %p198 = pneg %p56
        %p199 = pneg %p80
        %p200 = pneg %p77
        %p201 = pneg %p106
        %p202 = pneg %p103
        %s203 = sand.u32 %s93, 1
        %s204 = scalar_lea.sflag [#allocation4], %s203
        %s205 = sand.u32 %s93, 1
        %s206 = smul.addr %s205, 32
        %s207 = scalar_lea.vmem [#allocation5], %s206
        %p208 = pneg %p132
        %p209 = pneg %p129
        %s210 = sand.u32 %s119, 1
        %s211 = scalar_lea.sflag [#allocation7], %s210
        %s212 = sand.u32 %s119, 1
        %s213 = scalar_lea.vmem [#allocation6], %s212
        %p214 = scmp.eq.s32.totalorder %s29, 0
        // Predicated region
        $region33: #{tpu_custom_call.1} parent=27 // pred_check
          %p215 = pneg %p214
        $region34: #{tpu_custom_call.1} parent=27 // pred_check_branch
          %217 = sbr.rel (%p215) target = $region36
        $region35: #{tpu_custom_call.1} parent=27 // pred_region
          %vm218 = vcmask 523264
          %219 = vst.msk [vmem:[%s207] sm:$0xff] %vm218, 0.0
          %220 = vst.msk [vmem:[%s207 + $0x8] sm:$0xff] %vm218, 0.0
          %221 = vst.msk [vmem:[%s207 + $0x10] sm:$0xff] %vm218, 0.0
          %222 = vst.msk [vmem:[%s207 + $0x18] sm:$0xff] %vm218, 0.0
          %vm223 = vcmask 516096
          %224 = vst.msk [vmem:[%s213] sm:$0x1] %vm223, 0.0
        $region36: #{tpu_custom_call.1} parent=27 // pred_fallthru
          _
        %v225 = vld [vmem:[%s187] sm:$0xff]
        %v226 = vld [vmem:[%s187 + $0x8] sm:$0xff]
        %v227 = vld [vmem:[%s187 + $0x10] sm:$0xff]
        %v228 = vld [vmem:[%s187 + $0x18] sm:$0xff]
        %v229 = vld [vmem:[%s1] sm:$0xff]
        %v230 = vld [vmem:[%s1 + $0x8] sm:$0xff]
        %v231 = vld [vmem:[%s1 + $0x10] sm:$0xff]
        %v232 = vld [vmem:[%s1 + $0x18] sm:$0xff]
        %v233 = vld [vmem:[%s1 + $0x20] sm:$0xff]
        %v234 = vld [vmem:[%s1 + $0x28] sm:$0xff]
        %v235 = vld [vmem:[%s1 + $0x30] sm:$0xff]
        %v236 = vld [vmem:[%s1 + $0x38] sm:$0xff]
        %vm237 = vcmask 261120
        %v239 = vsel %vm237, %v229, 0
        %v242 = vsel %vm237, %v230, 0
        %v245 = vsel %vm237, %v231, 0
        %v248 = vsel %vm237, %v232, 0
        %v251 = vsel %vm237, %v233, 0
        %v254 = vsel %vm237, %v234, 0
        %v257 = vsel %vm237, %v235, 0
        %v260 = vsel %vm237, %v236, 0
        %262 = vmatprep.subr.mxu0 0.0
        %263 = vmatpush1.msra.mxu0 %v225
        %264 = vmatprep.subr.mxu0 0.0
        %265 = vmatpush1.msra.mxu0 %v226
        %266 = vmatprep.subr.mxu0 0.0
        %267 = vmatpush1.msra.mxu0 %v227
        %268 = vmatprep.subr.mxu0 0.0
        %269 = vmatpush1.msra.mxu0 %v228
        %270 = vmatprep.subr.mxu0 0.0
        %271 = vmatpush1.msra.mxu0 0.0
        %272 = vmatprep.subr.mxu0 0.0
        %273 = vmatpush1.msra.mxu0 0.0
        %274 = vmatprep.subr.mxu0 0.0
        %275 = vmatpush1.msra.mxu0 0.0
        %276 = vmatprep.subr.mxu0 0.0
        %277 = vmatpush1.msra.mxu0 0.0
        %278 = vmatprep.subr.mxu0 0.0
        %279 = vmatpush1.msra.mxu0 0.0
        %280 = vmatprep.subr.mxu0 0.0
        %281 = vmatpush1.msra.mxu0 0.0
        %282 = vmatprep.subr.mxu0 0.0
        %283 = vmatpush1.msra.mxu0 0.0
        %284 = vmatprep.subr.mxu0 0.0
        %285 = vmatpush1.msra.mxu0 0.0
        %286 = vmatprep.subr.mxu0 0.0
        %287 = vmatpush1.msra.mxu0 0.0
        %288 = vmatprep.subr.mxu0 0.0
        %289 = vmatpush1.msra.mxu0 0.0
        %290 = vmatprep.subr.mxu0 0.0
        %291 = vmatpush1.msra.mxu0 0.0
        %292 = vmatprep.subr.mxu0 0.0
        %293 = vmatpush1.msra.mxu0 0.0
        %294 = vmatprep.subr.mxu0 0.0
        %295 = vmatpush1.msra.mxu0 0.0
        %296 = vmatprep.subr.mxu0 0.0
        %297 = vmatpush1.msra.mxu0 0.0
        %298 = vmatprep.subr.mxu0 0.0
        %299 = vmatpush1.msra.mxu0 0.0
        %300 = vmatprep.subr.mxu0 0.0
        %301 = vmatpush1.msra.mxu0 0.0
        %302 = vmatprep.subr.mxu0 0.0
        %303 = vmatpush1.msra.mxu0 0.0
        %304 = vmatprep.subr.mxu0 0.0
        %305 = vmatpush1.msra.mxu0 0.0
        %306 = vmatprep.subr.mxu0 0.0
        %307 = vmatpush1.msra.mxu0 0.0
        %308 = vmatprep.subr.mxu0 0.0
        %309 = vmatpush1.msra.mxu0 0.0
        %310 = vmatprep.subr.mxu0 0.0
        %311 = vmatpush1.msra.mxu0 0.0
        %312 = vmatprep.subr.mxu0 0.0
        %313 = vmatpush1.msra.mxu0 0.0
        %314 = vmatprep.subr.mxu0 0.0
        %315 = vmatpush1.msra.mxu0 0.0
        %316 = vmatprep.subr.mxu0 0.0
        %317 = vmatpush1.msra.mxu0 0.0
        %318 = vmatprep.subr.mxu0 0.0
        %319 = vmatpush1.msra.mxu0 0.0
        %320 = vmatprep.subr.mxu0 0.0
        %321 = vmatpush1.msra.mxu0 0.0
        %322 = vmatprep.subr.mxu0 0.0
        %323 = vmatpush1.msra.mxu0 0.0
        %324 = vmatprep.subr.mxu0 0.0
        %325 = vmatpush1.msra.mxu0 0.0
        %326 = vmatprep.mubr.f32.mxu0 0.0
        %327 = vmatmul.mubr.f32.gmra.mrb[0].mxu0 %v239
        %v328 = vpop.f32.mrb[0].mxu0
        %v329 = vadd.f32 0.0, %v328
        %v330 = vpop.f32.mrb[0].mxu0
        %331 = vmatprep.mubr.f32.mxu0 0.0
        %332 = vmatmul.mubr.f32.gmra.mrb[0].mxu0 %v242
        %v333 = vpop.f32.mrb[0].mxu0
        %v334 = vadd.f32 0.0, %v333
        %v335 = vpop.f32.mrb[0].mxu0
        %336 = vmatprep.mubr.f32.mxu0 0.0
        %337 = vmatmul.mubr.f32.gmra.mrb[0].mxu0 %v245
        %v338 = vpop.f32.mrb[0].mxu0
        %v339 = vadd.f32 0.0, %v338
        %v340 = vpop.f32.mrb[0].mxu0
        %341 = vmatprep.mubr.f32.mxu0 0.0
        %342 = vmatmul.mubr.f32.gmra.mrb[0].mxu0 %v248
        %v343 = vpop.f32.mrb[0].mxu0
        %v344 = vadd.f32 0.0, %v343
        %v345 = vpop.f32.mrb[0].mxu0
        %346 = vmatprep.mubr.f32.mxu0 0.0
        %347 = vmatmul.mubr.f32.gmra.mrb[0].mxu0 %v251
        %v348 = vpop.f32.mrb[0].mxu0
        %v349 = vadd.f32 0.0, %v348
        %v350 = vpop.f32.mrb[0].mxu0
        %351 = vmatprep.mubr.f32.mxu0 0.0
        %352 = vmatmul.mubr.f32.gmra.mrb[0].mxu0 %v254
        %v353 = vpop.f32.mrb[0].mxu0
        %v354 = vadd.f32 0.0, %v353
        %v355 = vpop.f32.mrb[0].mxu0
        %356 = vmatprep.mubr.f32.mxu0 0.0
        %357 = vmatmul.mubr.f32.gmra.mrb[0].mxu0 %v257
        %v358 = vpop.f32.mrb[0].mxu0
        %v359 = vadd.f32 0.0, %v358
        %v360 = vpop.f32.mrb[0].mxu0
        %361 = vmatprep.mubr.f32.mxu0 0.0
        %362 = vmatmul.mubr.f32.gmra.mrb[0].mxu0 %v260
        %v363 = vpop.f32.mrb[0].mxu0
        %v364 = vadd.f32 0.0, %v363
        %v365 = vpop.f32.mrb[0].mxu0
        %366 = vdwg.mxu0
        %v367 = vlaneseq
        %v368 = vshrl.u32 %v367, 7
        %v369 = vadd.s32 %v368, 8
        %v370 = vadd.s32 %v368, 16
        %v371 = vadd.s32 %v368, 24
        %v372 = vadd.s32 %v368, 32
        %v373 = vadd.s32 %v368, 40
        %v374 = vadd.s32 %v368, 48
        %v375 = vadd.s32 %v368, 56
        %v376 = vmax.f32 %v329, %v349
        %v377 = vmax.f32 %v334, %v354
        %v378 = vmax.f32 %v339, %v359
        %v379 = vmax.f32 %v344, %v364
        %v380 = vmax.f32 %v376, %v377
        %v381 = vmax.f32 %v378, %v379
        %v382 = vmax.f32 %v380, %v381
        %v383 = vrot.slane %v382, 4
        %v384 = vmax.f32 %v382, %v383
        %v385 = vrot.slane %v384, 2
        %v386 = vmax.f32 %v384, %v385
        %v387 = vrot.slane %v386, 1
        %v388 = vmax.f32 %v386, %v387
        %vm389 = vcmp.eq.f32.partialorder %v329, %v388
        %vm390 = vcmp.eq.f32.partialorder %v334, %v388
        %vm391 = vcmp.eq.f32.partialorder %v339, %v388
        %vm392 = vcmp.eq.f32.partialorder %v344, %v388
        %vm393 = vcmp.eq.f32.partialorder %v349, %v388
        %vm394 = vcmp.eq.f32.partialorder %v354, %v388
        %vm395 = vcmp.eq.f32.partialorder %v359, %v388
        %vm396 = vcmp.eq.f32.partialorder %v364, %v388
        %v397 = vsel %vm389, %v368, 2147483647
        %v398 = vsel %vm390, %v369, 2147483647
        %v399 = vsel %vm391, %v370, 2147483647
        %v400 = vsel %vm392, %v371, 2147483647
        %v401 = vsel %vm393, %v372, 2147483647
        %v402 = vsel %vm394, %v373, 2147483647
        %v403 = vsel %vm395, %v374, 2147483647
        %v404 = vsel %vm396, %v375, 2147483647
        %vm405 = vcmp.lt.s32.totalorder %v397, %v401
        %v406 = vsel %vm405, %v397, %v401
        %vm407 = vcmp.lt.s32.totalorder %v398, %v402
        %v408 = vsel %vm407, %v398, %v402
        %vm409 = vcmp.lt.s32.totalorder %v399, %v403
        %v410 = vsel %vm409, %v399, %v403
        %vm411 = vcmp.lt.s32.totalorder %v400, %v404
        %v412 = vsel %vm411, %v400, %v404
        %vm413 = vcmp.lt.s32.totalorder %v406, %v408
        %v414 = vsel %vm413, %v406, %v408
        %vm415 = vcmp.lt.s32.totalorder %v410, %v412
        %v416 = vsel %vm415, %v410, %v412
        %vm417 = vcmp.lt.s32.totalorder %v414, %v416
        %v418 = vsel %vm417, %v414, %v416
        %v419 = vrot.slane %v418, 4
        %vm420 = vcmp.lt.s32.totalorder %v418, %v419
        %v421 = vsel %vm420, %v418, %v419
        %v422 = vrot.slane %v421, 2
        %vm423 = vcmp.lt.s32.totalorder %v421, %v422
        %v424 = vsel %vm423, %v421, %v422
        %v425 = vrot.slane %v424, 1
        %vm426 = vcmp.lt.s32.totalorder %v424, %v425
        %v427 = vsel %vm426, %v424, %v425
        %vm428 = vcmp.eq.s32.totalorder %v368, %v427
        %vm429 = vcmp.eq.s32.totalorder %v369, %v427
        %vm430 = vcmp.eq.s32.totalorder %v370, %v427
        %vm431 = vcmp.eq.s32.totalorder %v371, %v427
        %vm432 = vcmp.eq.s32.totalorder %v372, %v427
        %vm433 = vcmp.eq.s32.totalorder %v373, %v427
        %vm434 = vcmp.eq.s32.totalorder %v374, %v427
        %vm435 = vcmp.eq.s32.totalorder %v375, %v427
        %v436 = vsel %vm428, 1, 0
        %v437 = vsel %vm429, 1, 0
        %v438 = vsel %vm430, 1, 0
        %v439 = vsel %vm431, 1, 0
        %v440 = vsel %vm432, 1, 0
        %v441 = vsel %vm433, 1, 0
        %v442 = vsel %vm434, 1, 0
        %v443 = vsel %vm435, 1, 0
        %v444 = vcvt.s32.f32 %v436
        %v445 = vcvt.s32.f32 %v437
        %v446 = vcvt.s32.f32 %v438
        %v447 = vcvt.s32.f32 %v439
        %v448 = vcvt.s32.f32 %v440
        %v449 = vcvt.s32.f32 %v441
        %v450 = vcvt.s32.f32 %v442
        %v451 = vcvt.s32.f32 %v443
        %v452 = vld [vmem:[%s213] sm:$0x1]
        %453 = vmatprep.subr.mxu0 0.0
        %454 = vmatpush1.xpose.msra.mxu0 %v444
        %455 = vmatprep.subr.mxu0 0.0
        %456 = vmatpush1.xpose.msra.mxu0 %v445
        %457 = vmatprep.subr.mxu0 0.0
        %458 = vmatpush1.xpose.msra.mxu0 %v446
        %459 = vmatprep.subr.mxu0 0.0
        %460 = vmatpush1.xpose.msra.mxu0 %v447
        %461 = vmatprep.subr.mxu0 0.0
        %462 = vmatpush1.xpose.msra.mxu0 %v448
        %463 = vmatprep.subr.mxu0 0.0
        %464 = vmatpush1.xpose.msra.mxu0 %v449
        %465 = vmatprep.subr.mxu0 0.0
        %466 = vmatpush1.xpose.msra.mxu0 %v450
        %467 = vmatprep.subr.mxu0 0.0
        %468 = vmatpush1.xpose.msra.mxu0 %v451
        %469 = vmatprep.subr.mxu0 0.0
        %470 = vmatpush1.xpose.msra.mxu0 0.0
        %471 = vmatprep.subr.mxu0 0.0
        %472 = vmatpush1.xpose.msra.mxu0 0.0
        %473 = vmatprep.subr.mxu0 0.0
        %474 = vmatpush1.xpose.msra.mxu0 0.0
        %475 = vmatprep.subr.mxu0 0.0
        %476 = vmatpush1.xpose.msra.mxu0 0.0
        %477 = vmatprep.subr.mxu0 0.0
        %478 = vmatpush1.xpose.msra.mxu0 0.0
        %479 = vmatprep.subr.mxu0 0.0
        %480 = vmatpush1.xpose.msra.mxu0 0.0
        %481 = vmatprep.subr.mxu0 0.0
        %482 = vmatpush1.xpose.msra.mxu0 0.0
        %483 = vmatprep.subr.mxu0 0.0
        %484 = vmatpush1.xpose.msra.mxu0 0.0
        %485 = vmatprep.subr.mxu0 0.0
        %486 = vmatpush1.xpose.msra.mxu0 0.0
        %487 = vmatprep.subr.mxu0 0.0
        %488 = vmatpush1.xpose.msra.mxu0 0.0
        %489 = vmatprep.subr.mxu0 0.0
        %490 = vmatpush1.xpose.msra.mxu0 0.0
        %491 = vmatprep.subr.mxu0 0.0
        %492 = vmatpush1.xpose.msra.mxu0 0.0
        %493 = vmatprep.subr.mxu0 0.0
        %494 = vmatpush1.xpose.msra.mxu0 0.0
        %495 = vmatprep.subr.mxu0 0.0
        %496 = vmatpush1.xpose.msra.mxu0 0.0
        %497 = vmatprep.subr.mxu0 0.0
        %498 = vmatpush1.xpose.msra.mxu0 0.0
        %499 = vmatprep.subr.mxu0 0.0
        %500 = vmatpush1.xpose.msra.mxu0 0.0
        %501 = vmatprep.subr.mxu0 0.0
        %502 = vmatpush1.xpose.msra.mxu0 0.0
        %503 = vmatprep.subr.mxu0 0.0
        %504 = vmatpush1.xpose.msra.mxu0 0.0
        %505 = vmatprep.subr.mxu0 0.0
        %506 = vmatpush1.xpose.msra.mxu0 0.0
        %507 = vmatprep.subr.mxu0 0.0
        %508 = vmatpush1.xpose.msra.mxu0 0.0
        %509 = vmatprep.subr.mxu0 0.0
        %510 = vmatpush1.xpose.msra.mxu0 0.0
        %511 = vmatprep.subr.mxu0 0.0
        %512 = vmatpush1.xpose.msra.mxu0 0.0
        %513 = vmatprep.subr.mxu0 0.0
        %514 = vmatpush1.xpose.msra.mxu0 0.0
        %515 = vmatprep.subr.mxu0 0.0
        %516 = vmatpush1.xpose.msra.mxu0 0.0
        %517 = vmatprep.mubr.f32.mxu0 0.0
        %518 = vmatmul.mubr.f32.gmra.mrb[0].mxu0 1.0
        %v519 = vpop.f32.mrb[0].mxu0
        %v520 = vadd.f32 0.0, %v519
        %v521 = vpop.f32.mrb[0].mxu0
        %522 = vdwg.mxu0
        %v523 = vadd.f32 %v452, %v520
        %vm524 = vcmask 516096
        %525 = vst.msk [vmem:[%s213] sm:$0x1] %vm524, %v523
        %v526 = vld [vmem:[%s207] sm:$0xff]
        %v527 = vld [vmem:[%s207 + $0x8] sm:$0xff]
        %v528 = vld [vmem:[%s207 + $0x10] sm:$0xff]
        %v529 = vld [vmem:[%s207 + $0x18] sm:$0xff]
        %530 = vmatprep.subr.mxu0 0.0
        %531 = vmatpush1.xpose.msra.mxu0 %v444
        %532 = vmatprep.subr.mxu0 0.0
        %533 = vmatpush1.xpose.msra.mxu0 %v445
        %534 = vmatprep.subr.mxu0 0.0
        %535 = vmatpush1.xpose.msra.mxu0 %v446
        %536 = vmatprep.subr.mxu0 0.0
        %537 = vmatpush1.xpose.msra.mxu0 %v447
        %538 = vmatprep.subr.mxu0 0.0
        %539 = vmatpush1.xpose.msra.mxu0 %v448
        %540 = vmatprep.subr.mxu0 0.0
        %541 = vmatpush1.xpose.msra.mxu0 %v449
        %542 = vmatprep.subr.mxu0 0.0
        %543 = vmatpush1.xpose.msra.mxu0 %v450
        %544 = vmatprep.subr.mxu0 0.0
        %545 = vmatpush1.xpose.msra.mxu0 %v451
        %546 = vmatprep.subr.mxu0 0.0
        %547 = vmatpush1.xpose.msra.mxu0 0.0
        %548 = vmatprep.subr.mxu0 0.0
        %549 = vmatpush1.xpose.msra.mxu0 0.0
        %550 = vmatprep.subr.mxu0 0.0
        %551 = vmatpush1.xpose.msra.mxu0 0.0
        %552 = vmatprep.subr.mxu0 0.0
        %553 = vmatpush1.xpose.msra.mxu0 0.0
        %554 = vmatprep.subr.mxu0 0.0
        %555 = vmatpush1.xpose.msra.mxu0 0.0
        %556 = vmatprep.subr.mxu0 0.0
        %557 = vmatpush1.xpose.msra.mxu0 0.0
        %558 = vmatprep.subr.mxu0 0.0
        %559 = vmatpush1.xpose.msra.mxu0 0.0
        %560 = vmatprep.subr.mxu0 0.0
        %561 = vmatpush1.xpose.msra.mxu0 0.0
        %562 = vmatprep.subr.mxu0 0.0
        %563 = vmatpush1.xpose.msra.mxu0 0.0
        %564 = vmatprep.subr.mxu0 0.0
        %565 = vmatpush1.xpose.msra.mxu0 0.0
        %566 = vmatprep.subr.mxu0 0.0
        %567 = vmatpush1.xpose.msra.mxu0 0.0
        %568 = vmatprep.subr.mxu0 0.0
        %569 = vmatpush1.xpose.msra.mxu0 0.0
        %570 = vmatprep.subr.mxu0 0.0
        %571 = vmatpush1.xpose.msra.mxu0 0.0
        %572 = vmatprep.subr.mxu0 0.0
        %573 = vmatpush1.xpose.msra.mxu0 0.0
        %574 = vmatprep.subr.mxu0 0.0
        %575 = vmatpush1.xpose.msra.mxu0 0.0
        %576 = vmatprep.subr.mxu0 0.0
        %577 = vmatpush1.xpose.msra.mxu0 0.0
        %578 = vmatprep.subr.mxu0 0.0
        %579 = vmatpush1.xpose.msra.mxu0 0.0
        %580 = vmatprep.subr.mxu0 0.0
        %581 = vmatpush1.xpose.msra.mxu0 0.0
        %582 = vmatprep.subr.mxu0 0.0
        %583 = vmatpush1.xpose.msra.mxu0 0.0
        %584 = vmatprep.subr.mxu0 0.0
        %585 = vmatpush1.xpose.msra.mxu0 0.0
        %586 = vmatprep.subr.mxu0 0.0
        %587 = vmatpush1.xpose.msra.mxu0 0.0
        %588 = vmatprep.subr.mxu0 0.0
        %589 = vmatpush1.xpose.msra.mxu0 0.0
        %590 = vmatprep.subr.mxu0 0.0
        %591 = vmatpush1.xpose.msra.mxu0 0.0
        %592 = vmatprep.subr.mxu0 0.0
        %593 = vmatpush1.xpose.msra.mxu0 0.0
        %594 = vmatprep.mubr.f32.mxu0 0.0
        %595 = vmatmul.mubr.f32.gmra.mrb[0].mxu0 %v225
        %v596 = vpop.f32.mrb[0].mxu0
        %v597 = vadd.f32 0.0, %v596
        %v598 = vpop.f32.mrb[0].mxu0
        %599 = vmatprep.mubr.f32.mxu0 0.0
        %600 = vmatmul.mubr.f32.gmra.mrb[0].mxu0 %v226
        %v601 = vpop.f32.mrb[0].mxu0
        %v602 = vadd.f32 0.0, %v601
        %v603 = vpop.f32.mrb[0].mxu0
        %604 = vmatprep.mubr.f32.mxu0 0.0
        %605 = vmatmul.mubr.f32.gmra.mrb[0].mxu0 %v227
        %v606 = vpop.f32.mrb[0].mxu0
        %v607 = vadd.f32 0.0, %v606
        %v608 = vpop.f32.mrb[0].mxu0
        %609 = vmatprep.mubr.f32.mxu0 0.0
        %610 = vmatmul.mubr.f32.gmra.mrb[0].mxu0 %v228
        %v611 = vpop.f32.mrb[0].mxu0
        %v612 = vadd.f32 0.0, %v611
        %v613 = vpop.f32.mrb[0].mxu0
        %614 = vdwg.mxu0
        %v615 = vadd.f32 %v526, %v597
        %v616 = vadd.f32 %v527, %v602
        %v617 = vadd.f32 %v528, %v607
        %v618 = vadd.f32 %v529, %v612
        %vm619 = vcmask 523264
        %620 = vst.msk [vmem:[%s207] sm:$0xff] %vm619, %v615
        %621 = vst.msk [vmem:[%s207 + $0x8] sm:$0xff] %vm619, %v616
        %622 = vst.msk [vmem:[%s207 + $0x10] sm:$0xff] %vm619, %v617
        %623 = vst.msk [vmem:[%s207 + $0x18] sm:$0xff] %vm619, %v618
        %s624 = sand.u32 %s93, 1
        %s625 = scalar_lea.sflag [#allocation4], %s624
        %s626 = sand.u32 %s93, 1
        %s627 = smul.addr %s626, 32
        %s628 = scalar_lea.vmem [#allocation5], %s627
        %s629 = sand.u32 %s119, 1
        %s630 = scalar_lea.sflag [#allocation7], %s629
        %s631 = sand.u32 %s119, 1
        %s632 = scalar_lea.vmem [#allocation6], %s631
        // Predicated region
        $region37: #{tpu_custom_call.1} parent=27 // pred_check
          %p633 = pneg %p103
        $region38: #{tpu_custom_call.1} parent=27 // pred_check_branch
          %635 = sbr.rel (%p633) target = $region40
        $region39: #{tpu_custom_call.1} parent=27 // pred_region
          %s637 = ssub.s32 512, 512
          %638 = vsyncadd %s625, %s637
          %s639 = smul.addr %s28, 4
          %s640 = smul.addr %s639, 128
          %s641 = scalar_lea.hbm %s2, %s640
          %s642 = sshll.u32 %s628, 4
          %s643 = int_to_ptr.vmem [resolvable:$true] %s642
          %648 = dma.vmem_to_hbm [thread:$0]  %s643, 512, %s641, %s625, 128, 128, 8
        $region40: #{tpu_custom_call.1} parent=27 // pred_fallthru
          _
        // Predicated region
        $region41: #{tpu_custom_call.1} parent=27 // pred_check
          %p649 = pneg %p129
        $region42: #{tpu_custom_call.1} parent=27 // pred_check_branch
          %651 = sbr.rel (%p649) target = $region44
        $region43: #{tpu_custom_call.1} parent=27 // pred_region
          %s653 = ssub.s32 16, 16
          %654 = vsyncadd %s630, %s653
          %s655 = smul.addr %s28, 16
          %s656 = scalar_lea.hbm %s3, %s655
          %s658 = sshll.u32 %s632, 4
          %s659 = int_to_ptr.vmem [resolvable:$true] %s658
          %661 = dma.vmem_to_hbm [thread:$0]  %s659, 16, %s656, %s630
        $region44: #{tpu_custom_call.1} parent=27 // pred_fallthru
          _
      $region28: #{tpu_custom_call.1} parent=5 // pred_fallthru
        _
      %p662 = scmp.le.s32.totalorder 2, %s19
      // Predicated region
      $region45: #{tpu_custom_call.1} parent=5 // pred_check
        %p663 = pneg %p662
      $region46: #{tpu_custom_call.1} parent=5 // pred_check_branch
        %665 = sbr.rel (%p663) target = $region48
      $region47: #{tpu_custom_call.1} parent=5 // pred_region
        %s666 = ssub.s32 %s19, 2
        // Predicated region
        $region49: #{tpu_custom_call.1} parent=47 // pred_check
          %p667 = pneg %p109
        $region50: #{tpu_custom_call.1} parent=47 // pred_check_branch
          %669 = sbr.rel (%p667) target = $region52
        $region51: #{tpu_custom_call.1} parent=47 // pred_region
          %s670 = sand.u32 %s94, 1
          %s671 = scalar_lea.sflag [#allocation4], %s670
          %s672 = sand.u32 %s94, 1
          %s673 = smul.addr %s672, 32
          %s674 = scalar_lea.vmem [#allocation5], %s673
          %675 = dma.done %s671, 512
        $region52: #{tpu_custom_call.1} parent=47 // pred_fallthru
          _
        // Predicated region
        $region53: #{tpu_custom_call.1} parent=47 // pred_check
          %p676 = pneg %p135
        $region54: #{tpu_custom_call.1} parent=47 // pred_check_branch
          %678 = sbr.rel (%p676) target = $region56
        $region55: #{tpu_custom_call.1} parent=47 // pred_region
          %s679 = sand.u32 %s120, 1
          %s680 = scalar_lea.sflag [#allocation7], %s679
          %s681 = sand.u32 %s120, 1
          %s682 = scalar_lea.vmem [#allocation6], %s681
          %683 = dma.done %s680, 16
        $region56: #{tpu_custom_call.1} parent=47 // pred_fallthru
          _
      $region48: #{tpu_custom_call.1} parent=5 // pred_fallthru
        _
    $region6: #{tpu_custom_call.1} parent=1 // loop_footer
      %s23 = sadd.s32 1, %s19
    $region7: #{tpu_custom_call.1} parent=1 // loop_footer_branch
      %18 = sbr.rel target = $region3
    $region8: #{tpu_custom_call.1} parent=1 // loop_exit
      _
    %684 = vsyncpa [#allocation3], 1
    %s685 = scalar_lea.sflag [#allocation3], 1
    %686 = vsyncpa %s685, 1
    %687 = vsyncpa [#allocation4], 1
    %s688 = scalar_lea.sflag [#allocation4], 1
    %689 = vsyncpa %s688, 1
    %690 = vsyncpa [#allocation7], 1
    %s691 = scalar_lea.sflag [#allocation7], 1
    %692 = vsyncpa %s691, 1

</llo_original>
